<compile_context>
chip_gen: v5e
topology: v5e:2x2
jax: 0.10.0
libtpu: 0.0.40
codegen_flags: <defaults>
</compile_context>

<pallas_src>
import functools

import jax
import jax.numpy as jnp
from jax import lax
from jax.experimental import pallas as pl
from jax.experimental.pallas import tpu as pltpu


def _round_up(x, m):
    return (x + m - 1) // m * m


# --------------------- fused gather + dot + sigmoid_range ---------------------
def _fused_kernel(uidx_ref, midx_ref, utab_ref, mtab_ref, o_ref, *, min_val, max_val):
    # uidx_ref, midx_ref : (1, TB)     int32   per-tile index rows (lane-dense)
    # utab_ref           : (Fa, NU)    float32 augmented user table (VMEM-resident)
    # mtab_ref           : (Fa, NM)    float32 augmented movie table (VMEM-resident)
    # o_ref              : (1, TB)     float32
    tb = o_ref.shape[1]
    nu = utab_ref.shape[1]
    nm = mtab_ref.shape[1]

    # One-hot gather on the (otherwise idle) MXU:  (Fa, N) @ (N, TB) -> (Fa, TB).
    oh_u = (lax.broadcasted_iota(jnp.int32, (nu, tb), 0) == uidx_ref[...]).astype(jnp.float32)
    oh_m = (lax.broadcasted_iota(jnp.int32, (nm, tb), 0) == midx_ref[...]).astype(jnp.float32)
    u = jnp.dot(utab_ref[...], oh_u,
                precision=jax.lax.Precision.HIGHEST,
                preferred_element_type=jnp.float32)                    # (Fa, TB)
    m = jnp.dot(mtab_ref[...], oh_m,
                precision=jax.lax.Precision.HIGHEST,
                preferred_element_type=jnp.float32)                    # (Fa, TB)

    # Bias terms ride along as augmented factor rows, so one sublane reduce
    # yields dot + user_bias + movie_bias for every batch lane.
    s = jnp.sum(u * m, axis=0, keepdims=True)                          # (1, TB)
    o_ref[...] = (max_val - min_val) * jax.nn.sigmoid(s) + min_val


# --------------- fallback: stream pre-gathered (Fa, TB) factor blocks ---------------
def _stream_kernel(u_ref, m_ref, o_ref, *, min_val, max_val):
    # u_ref, m_ref : (Fa, TB) float32 ;  o_ref : (1, TB) float32
    # TODO(synk): optionally stream these blocks as bf16 and upcast right after
    # load (halves HBM bytes of the dominant streams on the fallback path).
    s = jnp.sum(u_ref[...] * m_ref[...], axis=0, keepdims=True)
    o_ref[...] = (max_val - min_val) * jax.nn.sigmoid(s) + min_val


def collfilt_forward(t_input, user_factors, user_bias, movie_factors, movie_bias,
                     output_range=(0.0, 5.5), block_b=None):
    """Equivalent of CollFilt.forward.  t_input: (B, 2) int32 of [user, movie]."""
    users_t = t_input[:, 0].astype(jnp.int32)
    movies_t = t_input[:, 1].astype(jnp.int32)
    B = users_t.shape[0]
    n_u, F = user_factors.shape
    n_m = movie_factors.shape[0]
    min_val, max_val = float(output_range[0]), float(output_range[1])

    # Fold both bias tables into the factor tables as two extra "factor" rows:
    #   Ua = [U | ub | 1],  Ma = [M | 1 | mb]  =>  <Ua[u], Ma[m]> = U[u].M[m] + ub[u] + mb[m]
    Ua = jnp.concatenate([user_factors.astype(jnp.float32),
                          user_bias.astype(jnp.float32).reshape(n_u, 1),
                          jnp.ones((n_u, 1), jnp.float32)], axis=1)      # (n_u, F+2)
    Ma = jnp.concatenate([movie_factors.astype(jnp.float32),
                          jnp.ones((n_m, 1), jnp.float32),
                          movie_bias.astype(jnp.float32).reshape(n_m, 1)], axis=1)  # (n_m, F+2)
    Fa = F + 2
    Fa_p = _round_up(Fa, 8)           # padded factor rows contribute 0 to the dot
    n_up = _round_up(n_u, 8)
    n_mp = _round_up(n_m, 8)

    # Factor-major tables (Fa_p, n): the gather output is lane-dense by construction.
    UaT = jnp.pad(Ua, ((0, n_up - n_u), (0, Fa_p - Fa))).T               # (Fa_p, n_up)
    MaT = jnp.pad(Ma, ((0, n_mp - n_m), (0, Fa_p - Fa))).T               # (Fa_p, n_mp)

    # Fused (table-resident) path only when the tables + one-hot working set are
    # comfortably small on every generation (incl. v7x's 64 MiB physical VMEM).
    table_bytes = int(UaT.size + MaT.size) * 4
    use_fused = (table_bytes <= (4 << 20)) and (n_up + n_mp <= 4096)

    # F-aware tile sizing: keep per-step VMEM working set ~ a few MiB.
    if use_fused:
        per_col = (n_up + n_mp + 2 * Fa_p) * 4       # one-hots + gathered blocks
    else:
        per_col = 2 * Fa_p * 4                       # two streamed (Fa_p, TB) blocks
    tb_cap = max(128, (6 << 20) // per_col // 128 * 128)
    if block_b is not None:
        tb_cap = min(tb_cap, _round_up(int(block_b), 128))
    TB = min(tb_cap, _round_up(B, 128))
    # Keep >= 2 grid steps when the batch is big enough so both v7x TCs get work.
    if B <= TB and B > 256:
        TB = min(TB, _round_up((B + 1) // 2, 128))

    Bp = _round_up(B, TB)
    pad = Bp - B
    users_p = jnp.pad(users_t, (0, pad)).reshape(1, Bp)
    movies_p = jnp.pad(movies_t, (0, pad)).reshape(1, Bp)
    grid = (Bp // TB,)

    if use_fused:
        kernel = functools.partial(_fused_kernel, min_val=min_val, max_val=max_val)
        cost = pl.CostEstimate(
            flops=2 * Fa_p * (n_up + n_mp) * Bp + 3 * Fa_p * Bp,
            transcendentals=Bp,
            bytes_accessed=3 * Bp * 4 + table_bytes)
        out = pl.pallas_call(
            kernel,
            out_shape=jax.ShapeDtypeStruct((1, Bp), jnp.float32),
            grid=grid,
            in_specs=[
                pl.BlockSpec((1, TB), lambda i: (0, i)),
                pl.BlockSpec((1, TB), lambda i: (0, i)),
                # Whole tables, constant block index -> fetched once, stay in VMEM.
                pl.BlockSpec((Fa_p, n_up), lambda i: (0, 0)),
                pl.BlockSpec((Fa_p, n_mp), lambda i: (0, 0)),
            ],
            out_specs=pl.BlockSpec((1, TB), lambda i: (0, i)),
            compiler_params=pltpu.CompilerParams(
                dimension_semantics=("parallel",)),
            cost_estimate=cost,
        )(users_p, movies_p, UaT, MaT)
    else:
        # Large tables: XLA gather straight from the factor-major tables (already
        # lane-dense, no separate .T relayout) feeding the streaming kernel.
        users_g = jnp.take(UaT, users_p[0], axis=1)      # (Fa_p, Bp)
        movies_g = jnp.take(MaT, movies_p[0], axis=1)    # (Fa_p, Bp)
        kernel = functools.partial(_stream_kernel, min_val=min_val, max_val=max_val)
        cost = pl.CostEstimate(
            flops=3 * Fa_p * Bp,
            transcendentals=Bp,
            bytes_accessed=(2 * Fa_p + 1) * Bp * 4)
        out = pl.pallas_call(
            kernel,
            out_shape=jax.ShapeDtypeStruct((1, Bp), jnp.float32),
            grid=grid,
            in_specs=[
                pl.BlockSpec((Fa_p, TB), lambda i: (0, i)),
                pl.BlockSpec((Fa_p, TB), lambda i: (0, i)),
            ],
            out_specs=pl.BlockSpec((1, TB), lambda i: (0, i)),
            compiler_params=pltpu.CompilerParams(
                dimension_semantics=("parallel",),
                allow_input_fusion=[True, True]),
            cost_estimate=cost,
        )(users_g, movies_g)

    return out[0, :B]  # (B,)


def _reference_forward(t_input, user_factors, user_bias, movie_factors, movie_bias,
                       output_range=(0.0, 5.5)):
    users_t = t_input[:, 0]
    movies_t = t_input[:, 1]
    users = user_factors[users_t]
    movies = movie_factors[movies_t]
    dot = (users * movies).sum(axis=1)
    dot = dot + user_bias[users_t][:, 0] + movie_bias[movies_t][:, 0]
    lo, hi = output_range
    return (hi - lo) * jax.nn.sigmoid(dot) + lo


if __name__ == "__main__":
    # Small, deterministic problem: n_users=10, n_movies=12, n_factors=32, batch=8.
    n_users, n_movies, n_factors, batch = 10, 12, 32, 8

    key = jax.random.PRNGKey(0)
    k_uf, k_ub, k_mf, k_mb, k_u, k_m = jax.random.split(key, 6)

    # nn.Embedding default init ~ N(0, 1)
    user_factors = jax.random.normal(k_uf, (n_users, n_factors), dtype=jnp.float32)
    user_bias = jax.random.normal(k_ub, (n_users, 1), dtype=jnp.float32)
    movie_factors = jax.random.normal(k_mf, (n_movies, n_factors), dtype=jnp.float32)
    movie_bias = jax.random.normal(k_mb, (n_movies, 1), dtype=jnp.float32)

    users_idx = jax.random.randint(k_u, (batch,), 0, n_users, dtype=jnp.int32)
    movies_idx = jax.random.randint(k_m, (batch,), 0, n_movies, dtype=jnp.int32)
    t_input = jnp.stack([users_idx, movies_idx], axis=1)  # (B, 2) int32

    out = collfilt_forward(t_input, user_factors, user_bias, movie_factors, movie_bias)
    out = jax.block_until_ready(out)

    ref = _reference_forward(t_input, user_factors, user_bias, movie_factors, movie_bias)
    assert out.shape == (batch,)
    assert jnp.allclose(out, ref, atol=1e-4, rtol=1e-4)

    print("KERNEL_OK")
</pallas_src>

<mosaic_0001>
module attributes {stable_mosaic.version = 11 : i64} {
  func.func @_fused_kernel(%arg0: i32, %arg1: memref<1x128xi32, #tpu.memory_space<vmem>>, %arg2: memref<1x128xi32, #tpu.memory_space<vmem>>, %arg3: memref<40x16xf32, #tpu.memory_space<vmem>>, %arg4: memref<40x16xf32, #tpu.memory_space<vmem>>, %arg5: memref<1x128xf32, #tpu.memory_space<vmem>>) attributes {dimension_semantics = [#tpu.dimension_semantics<parallel>], iteration_bounds = array<i64: 1>, scalar_prefetch = 0 : i64, scratch_operands = 0 : i64, tpu.core_type = #tpu.core_type<tc>, window_params = [{transform_indices = @transform_0, window_bounds = array<i64: 1, 128>}, {transform_indices = @transform_1, window_bounds = array<i64: 1, 128>}, {pipeline_mode = #tpu.pipeline_mode<synchronous>, transform_indices = @transform_2, window_bounds = array<i64: 40, 16>}, {pipeline_mode = #tpu.pipeline_mode<synchronous>, transform_indices = @transform_3, window_bounds = array<i64: 40, 16>}, {transform_indices = @transform_4, window_bounds = array<i64: 1, 128>}]} {
    %0 = tpu.iota {dimensions = array<i32: 0>} : vector<16x128xi32>
    %c0 = arith.constant 0 : index
    %c0_0 = arith.constant 0 : index
    %1 = vector.load %arg1[%c0, %c0_0] : memref<1x128xi32, #tpu.memory_space<vmem>>, vector<1x128xi32>
    %2 = vector.broadcast %1 : vector<1x128xi32> to vector<16x128xi32>
    %3 = arith.cmpi eq, %0, %2 : vector<16x128xi32>
    %4 = arith.extui %3 : vector<16x128xi1> to vector<16x128xi32>
    %5 = arith.sitofp %4 : vector<16x128xi32> to vector<16x128xf32>
    %6 = tpu.iota {dimensions = array<i32: 0>} : vector<16x128xi32>
    %c0_1 = arith.constant 0 : index
    %c0_2 = arith.constant 0 : index
    %7 = vector.load %arg2[%c0_1, %c0_2] : memref<1x128xi32, #tpu.memory_space<vmem>>, vector<1x128xi32>
    %8 = vector.broadcast %7 : vector<1x128xi32> to vector<16x128xi32>
    %9 = arith.cmpi eq, %6, %8 : vector<16x128xi32>
    %10 = arith.extui %9 : vector<16x128xi1> to vector<16x128xi32>
    %11 = arith.sitofp %10 : vector<16x128xi32> to vector<16x128xf32>
    %c0_3 = arith.constant 0 : index
    %c0_4 = arith.constant 0 : index
    %12 = vector.load %arg3[%c0_3, %c0_4] : memref<40x16xf32, #tpu.memory_space<vmem>>, vector<40x16xf32>
    %cst = arith.constant dense<0.000000e+00> : vector<40x128xf32>
    %13 = tpu.matmul %12, %5, %cst {dimension_numbers = #tpu.dot_dimension_numbers<[1], [0], [0], [1], [0, 0, 1, 1], [], []>, precision = #tpu.contract_precision<fp32>} : vector<40x16xf32>, vector<16x128xf32>, vector<40x128xf32> -> vector<40x128xf32>
    %c0_5 = arith.constant 0 : index
    %c0_6 = arith.constant 0 : index
    %14 = vector.load %arg4[%c0_5, %c0_6] : memref<40x16xf32, #tpu.memory_space<vmem>>, vector<40x16xf32>
    %cst_7 = arith.constant dense<0.000000e+00> : vector<40x128xf32>
    %15 = tpu.matmul %14, %11, %cst_7 {dimension_numbers = #tpu.dot_dimension_numbers<[1], [0], [0], [1], [0, 0, 1, 1], [], []>, precision = #tpu.contract_precision<fp32>} : vector<40x16xf32>, vector<16x128xf32>, vector<40x128xf32> -> vector<40x128xf32>
    %16 = arith.mulf %13, %15 : vector<40x128xf32>
    %cst_8 = arith.constant dense<0.000000e+00> : vector<128xf32>
    %17 = vector.multi_reduction <add>, %16, %cst_8 [0] : vector<40x128xf32> to vector<128xf32>
    %18 = vector.shape_cast %17 : vector<128xf32> to vector<1x128xf32>
    %19 = arith.negf %18 : vector<1x128xf32>
    %20 = math.exp %19 : vector<1x128xf32>
    %cst_9 = arith.constant 1.000000e+00 : f32
    %21 = vector.broadcast %cst_9 : f32 to vector<1x128xf32>
    %22 = arith.addf %21, %20 : vector<1x128xf32>
    %23 = arith.divf %21, %22 : vector<1x128xf32>
    %cst_10 = arith.constant 5.500000e+00 : f32
    %24 = vector.broadcast %cst_10 : f32 to vector<1x128xf32>
    %25 = arith.mulf %24, %23 : vector<1x128xf32>
    %cst_11 = arith.constant 0.000000e+00 : f32
    %26 = vector.broadcast %cst_11 : f32 to vector<1x128xf32>
    %27 = arith.addf %25, %26 : vector<1x128xf32>
    %c0_12 = arith.constant 0 : index
    %c0_13 = arith.constant 0 : index
    %28 = vector.load %arg5[%c0_12, %c0_13] : memref<1x128xf32, #tpu.memory_space<vmem>>, vector<1x128xf32>
    tpu.vector_store %arg5[%c0_12, %c0_13], %27 {strides = array<i32>} : memref<1x128xf32, #tpu.memory_space<vmem>>, vector<1x128xf32>,
    return
  }
  func.func @transform_0(%arg0: i32) -> (i32, i32) {
    %c0_i32 = arith.constant 0 : i32
    %c0_i32_0 = arith.constant 0 : i32
    return %c0_i32, %arg0 : i32, i32
  }
  func.func @transform_1(%arg0: i32) -> (i32, i32) {
    %c0_i32 = arith.constant 0 : i32
    %c0_i32_0 = arith.constant 0 : i32
    return %c0_i32, %arg0 : i32, i32
  }
  func.func @transform_2(%arg0: i32) -> (i32, i32) {
    %c0_i32 = arith.constant 0 : i32
    %c0_i32_0 = arith.constant 0 : i32
    %c0_i32_1 = arith.constant 0 : i32
    return %c0_i32, %c0_i32_0 : i32, i32
  }
  func.func @transform_3(%arg0: i32) -> (i32, i32) {
    %c0_i32 = arith.constant 0 : i32
    %c0_i32_0 = arith.constant 0 : i32
    %c0_i32_1 = arith.constant 0 : i32
    return %c0_i32, %c0_i32_0 : i32, i32
  }
  func.func @transform_4(%arg0: i32) -> (i32, i32) {
    %c0_i32 = arith.constant 0 : i32
    %c0_i32_0 = arith.constant 0 : i32
    return %c0_i32, %arg0 : i32, i32
  }
}

</mosaic_0001>

<llo_original>
// kernel: tpu_custom_call.1
$region0: #{tpu_custom_call.1}
  #allocation0 [shape = 'u32[]', space=smem, size = 0x4, offset = 0x4, fixed_abs, tag = 'smem constant byte address 0x4 - core index']
  #allocation1 [shape = 'u32[72,128]{1,0:T(1,128)}', space=vmem, size = 0x9000, scoped, tag = 'internal scratch']
  %s0 = inlined_call_operand.vmem [shape: s32[1,128], index: 0, kind: input, shape index: {}]
  %s1 = inlined_call_operand.vmem [shape: s32[1,128], index: 1, kind: input, shape index: {}]
  %s2 = inlined_call_operand.vmem [shape: f32[40,16], index: 2, kind: input, shape index: {}]
  %s3 = inlined_call_operand.vmem [shape: f32[40,16], index: 3, kind: input, shape index: {}]
  %s4 = inlined_call_operand.hbm [shape: f32[1,128], index: 4, kind: output, shape index: {}]
  %s5 = sld [smem:[#allocation0]]
  $region26: #{tpu_custom_call.1} parent=0
    _
  %s7 = ssub.s32 1, %s5
  %s8 = scalar_select 0, %s7, %s5
  $region1: #{tpu_custom_call.1} parent=0
    #allocation2 [shape = 'u8[512]{0}', space=vmem, size = 0x400, scoped, tag = 'output window, operand 0, single buffered']
    #allocation3 [shape = 's32[1]{0}', space=sflag, size = 0x4, scoped, tag = 'scoped memory for tpu_custom_call.1']
    %9 = vsyncpa [#allocation3], 0
    // Predicated region
    $region2: #{tpu_custom_call.1} parent=1 // pred_check
      _
    $region3: #{tpu_custom_call.1} parent=1 // pred_check_branch
      %11 = sbr.rel (0) target = $region5
    $region4: #{tpu_custom_call.1} parent=1 // pred_region
      _
    $region5: #{tpu_custom_call.1} parent=1 // pred_fallthru
      _
    // Predicated region
    $region6: #{tpu_custom_call.1} parent=1 // pred_check
      _
    $region7: #{tpu_custom_call.1} parent=1 // pred_check_branch
      %13 = sbr.rel (0) target = $region9
    $region8: #{tpu_custom_call.1} parent=1 // pred_region
      _
    $region9: #{tpu_custom_call.1} parent=1 // pred_fallthru
      _
    // Predicated region
    $region10: #{tpu_custom_call.1} parent=1 // pred_check
      _
    $region11: #{tpu_custom_call.1} parent=1 // pred_check_branch
      %15 = sbr.rel (0) target = $region13
    $region12: #{tpu_custom_call.1} parent=1 // pred_region
      _
    $region13: #{tpu_custom_call.1} parent=1 // pred_fallthru
      _
    // Predicated region
    $region14: #{tpu_custom_call.1} parent=1 // pred_check
      _
    $region15: #{tpu_custom_call.1} parent=1 // pred_check_branch
      %17 = sbr.rel (0) target = $region17
    $region16: #{tpu_custom_call.1} parent=1 // pred_region
      _
    $region17: #{tpu_custom_call.1} parent=1 // pred_fallthru
      _
    %v18 = vlaneseq
    %v19 = vshrl.u32 %v18, 7
    %v20 = vadd.s32 %v19, 8
    %v21 = vld [vmem:[%s0] sm:$0x1]
    %v22 = vperm.slane %v21, 0
    %vm23 = vcmp.eq.s32.totalorder %v19, %v22
    %vm24 = vcmp.eq.s32.totalorder %v20, %v22
    %v25 = vsel %vm23, 1, 0
    %v26 = vsel %vm24, 1, 0
    %v27 = vcvt.s32.f32 %v25
    %v28 = vcvt.s32.f32 %v26
    %v29 = vld [vmem:[%s1] sm:$0x1]
    %v30 = vperm.slane %v29, 0
    %vm31 = vcmp.eq.s32.totalorder %v19, %v30
    %vm32 = vcmp.eq.s32.totalorder %v20, %v30
    %v33 = vsel %vm31, 1, 0
    %v34 = vsel %vm32, 1, 0
    %v35 = vcvt.s32.f32 %v33
    %v36 = vcvt.s32.f32 %v34
    %v37 = vld [vmem:[%s2] sm:$0xff]
    %v38 = vld [vmem:[%s2 + $0x8] sm:$0xff]
    %v39 = vld [vmem:[%s2 + $0x10] sm:$0xff]
    %v40 = vld [vmem:[%s2 + $0x18] sm:$0xff]
    %v41 = vld [vmem:[%s2 + $0x20] sm:$0xff]
    %vm42 = vcmask 130048
    %v44 = vsel %vm42, %v37, 0
    %v47 = vsel %vm42, %v38, 0
    %v50 = vsel %vm42, %v39, 0
    %v53 = vsel %vm42, %v40, 0
    %v56 = vsel %vm42, %v41, 0
    %58 = vmatpush.msra.mxu0 0.0
    %59 = vmatpush.msra.mxu0 0.0
    %60 = vmatpush.msra.mxu0 0.0
    %61 = vmatpush.msra.mxu0 0.0
    %62 = vmatpush.msra.mxu0 0.0
    %63 = vmatpush.msra.mxu0 0.0
    %64 = vmatpush.msra.mxu0 0.0
    %65 = vmatpush.msra.mxu0 0.0
    %66 = vmatpush.msra.mxu0 0.0
    %67 = vmatpush.msra.mxu0 0.0
    %68 = vmatpush.msra.mxu0 0.0
    %69 = vmatpush.msra.mxu0 0.0
    %70 = vmatpush.msra.mxu0 0.0
    %71 = vmatpush.msra.mxu0 0.0
    %v72 = vand.u32 %v28, 4294901760
    %73 = vmatpush.msra.mxu0 %v72
    %v74 = vand.u32 %v27, 4294901760
    %75 = vmatpush.msra.mxu0 %v74
    %v76 = vand.u32 %v44, 4294901760
    %v77 = vsub.f32 %v44, %v76
    %v78 = vand.u32 %v77, 4294901760
    %v79 = vsub.f32 %v77, %v78
    %v80 = vand.u32 %v79, 4294901760
    %81 = vmatmul.f32.gmra.mxu0 %v80
    %v82 = vpop.f32.mrf.mxu0
    %v83 = vadd.f32 0.0, %v82
    %v84 = vand.u32 %v47, 4294901760
    %v85 = vsub.f32 %v47, %v84
    %v86 = vand.u32 %v85, 4294901760
    %v87 = vsub.f32 %v85, %v86
    %v88 = vand.u32 %v87, 4294901760
    %89 = vmatmul.f32.gmra.mxu0 %v88
    %v90 = vpop.f32.mrf.mxu0
    %v91 = vadd.f32 0.0, %v90
    %v92 = vand.u32 %v50, 4294901760
    %v93 = vsub.f32 %v50, %v92
    %v94 = vand.u32 %v93, 4294901760
    %v95 = vsub.f32 %v93, %v94
    %v96 = vand.u32 %v95, 4294901760
    %97 = vmatmul.f32.gmra.mxu0 %v96
    %v98 = vpop.f32.mrf.mxu0
    %v99 = vadd.f32 0.0, %v98
    %v100 = vand.u32 %v53, 4294901760
    %v101 = vsub.f32 %v53, %v100
    %v102 = vand.u32 %v101, 4294901760
    %v103 = vsub.f32 %v101, %v102
    %v104 = vand.u32 %v103, 4294901760
    %105 = vmatmul.f32.gmra.mxu0 %v104
    %v106 = vpop.f32.mrf.mxu0
    %v107 = vadd.f32 0.0, %v106
    %v108 = vand.u32 %v56, 4294901760
    %v109 = vsub.f32 %v56, %v108
    %v110 = vand.u32 %v109, 4294901760
    %v111 = vsub.f32 %v109, %v110
    %v112 = vand.u32 %v111, 4294901760
    %113 = vmatmul.f32.gmra.mxu0 %v112
    %v114 = vpop.f32.mrf.mxu0
    %v115 = vadd.f32 0.0, %v114
    %116 = vdwg.mxu0
    %117 = vmatpush.msra.mxu0 0.0
    %118 = vmatpush.msra.mxu0 0.0
    %119 = vmatpush.msra.mxu0 0.0
    %120 = vmatpush.msra.mxu0 0.0
    %121 = vmatpush.msra.mxu0 0.0
    %122 = vmatpush.msra.mxu0 0.0
    %123 = vmatpush.msra.mxu0 0.0
    %124 = vmatpush.msra.mxu0 0.0
    %125 = vmatpush.msra.mxu0 0.0
    %126 = vmatpush.msra.mxu0 0.0
    %127 = vmatpush.msra.mxu0 0.0
    %128 = vmatpush.msra.mxu0 0.0
    %129 = vmatpush.msra.mxu0 0.0
    %130 = vmatpush.msra.mxu0 0.0
    %v131 = vand.u32 %v28, 4294901760
    %v132 = vsub.f32 %v28, %v131
    %v133 = vand.u32 %v132, 4294901760
    %v134 = vsub.f32 %v132, %v133
    %v135 = vand.u32 %v134, 4294901760
    %136 = vmatpush.msra.mxu0 %v135
    %v137 = vand.u32 %v27, 4294901760
    %v138 = vsub.f32 %v27, %v137
    %v139 = vand.u32 %v138, 4294901760
    %v140 = vsub.f32 %v138, %v139
    %v141 = vand.u32 %v140, 4294901760
    %142 = vmatpush.msra.mxu0 %v141
    %v143 = vand.u32 %v44, 4294901760
    %144 = vmatmul.f32.gmra.mxu0 %v143
    %v145 = vpop.f32.mrf.mxu0
    %v146 = vadd.f32 %v83, %v145
    %v147 = vand.u32 %v47, 4294901760
    %148 = vmatmul.f32.gmra.mxu0 %v147
    %v149 = vpop.f32.mrf.mxu0
    %v150 = vadd.f32 %v91, %v149
    %v151 = vand.u32 %v50, 4294901760
    %152 = vmatmul.f32.gmra.mxu0 %v151
    %v153 = vpop.f32.mrf.mxu0
    %v154 = vadd.f32 %v99, %v153
    %v155 = vand.u32 %v53, 4294901760
    %156 = vmatmul.f32.gmra.mxu0 %v155
    %v157 = vpop.f32.mrf.mxu0
    %v158 = vadd.f32 %v107, %v157
    %v159 = vand.u32 %v56, 4294901760
    %160 = vmatmul.f32.gmra.mxu0 %v159
    %v161 = vpop.f32.mrf.mxu0
    %v162 = vadd.f32 %v115, %v161
    %163 = vdwg.mxu0
    %164 = vmatpush.msra.mxu0 0.0
    %165 = vmatpush.msra.mxu0 0.0
    %166 = vmatpush.msra.mxu0 0.0
    %167 = vmatpush.msra.mxu0 0.0
    %168 = vmatpush.msra.mxu0 0.0
    %169 = vmatpush.msra.mxu0 0.0
    %170 = vmatpush.msra.mxu0 0.0
    %171 = vmatpush.msra.mxu0 0.0
    %172 = vmatpush.msra.mxu0 0.0
    %173 = vmatpush.msra.mxu0 0.0
    %174 = vmatpush.msra.mxu0 0.0
    %175 = vmatpush.msra.mxu0 0.0
    %176 = vmatpush.msra.mxu0 0.0
    %177 = vmatpush.msra.mxu0 0.0
    %v178 = vand.u32 %v28, 4294901760
    %v179 = vsub.f32 %v28, %v178
    %180 = vmatpush.msra.mxu0 %v179
    %v181 = vand.u32 %v27, 4294901760
    %v182 = vsub.f32 %v27, %v181
    %183 = vmatpush.msra.mxu0 %v182
    %v184 = vand.u32 %v44, 4294901760
    %v185 = vsub.f32 %v44, %v184
    %186 = vmatmul.f32.gmra.mxu0 %v185
    %v187 = vpop.f32.mrf.mxu0
    %v188 = vadd.f32 %v146, %v187
    %v189 = vand.u32 %v47, 4294901760
    %v190 = vsub.f32 %v47, %v189
    %191 = vmatmul.f32.gmra.mxu0 %v190
    %v192 = vpop.f32.mrf.mxu0
    %v193 = vadd.f32 %v150, %v192
    %v194 = vand.u32 %v50, 4294901760
    %v195 = vsub.f32 %v50, %v194
    %196 = vmatmul.f32.gmra.mxu0 %v195
    %v197 = vpop.f32.mrf.mxu0
    %v198 = vadd.f32 %v154, %v197
    %v199 = vand.u32 %v53, 4294901760
    %v200 = vsub.f32 %v53, %v199
    %201 = vmatmul.f32.gmra.mxu0 %v200
    %v202 = vpop.f32.mrf.mxu0
    %v203 = vadd.f32 %v158, %v202
    %v204 = vand.u32 %v56, 4294901760
    %v205 = vsub.f32 %v56, %v204
    %206 = vmatmul.f32.gmra.mxu0 %v205
    %v207 = vpop.f32.mrf.mxu0
    %v208 = vadd.f32 %v162, %v207
    %209 = vdwg.mxu0
    %210 = vmatpush.msra.mxu0 0.0
    %211 = vmatpush.msra.mxu0 0.0
    %212 = vmatpush.msra.mxu0 0.0
    %213 = vmatpush.msra.mxu0 0.0
    %214 = vmatpush.msra.mxu0 0.0
    %215 = vmatpush.msra.mxu0 0.0
    %216 = vmatpush.msra.mxu0 0.0
    %217 = vmatpush.msra.mxu0 0.0
    %218 = vmatpush.msra.mxu0 0.0
    %219 = vmatpush.msra.mxu0 0.0
    %220 = vmatpush.msra.mxu0 0.0
    %221 = vmatpush.msra.mxu0 0.0
    %222 = vmatpush.msra.mxu0 0.0
    %223 = vmatpush.msra.mxu0 0.0
    %v224 = vand.u32 %v28, 4294901760
    %225 = vmatpush.msra.mxu0 %v224
    %v226 = vand.u32 %v27, 4294901760
    %227 = vmatpush.msra.mxu0 %v226
    %v228 = vand.u32 %v44, 4294901760
    %v229 = vsub.f32 %v44, %v228
    %v230 = vand.u32 %v229, 4294901760
    %231 = vmatmul.f32.gmra.mxu0 %v230
    %v232 = vpop.f32.mrf.mxu0
    %v233 = vadd.f32 %v188, %v232
    %v234 = vand.u32 %v47, 4294901760
    %v235 = vsub.f32 %v47, %v234
    %v236 = vand.u32 %v235, 4294901760
    %237 = vmatmul.f32.gmra.mxu0 %v236
    %v238 = vpop.f32.mrf.mxu0
    %v239 = vadd.f32 %v193, %v238
    %v240 = vand.u32 %v50, 4294901760
    %v241 = vsub.f32 %v50, %v240
    %v242 = vand.u32 %v241, 4294901760
    %243 = vmatmul.f32.gmra.mxu0 %v242
    %v244 = vpop.f32.mrf.mxu0
    %v245 = vadd.f32 %v198, %v244
    %v246 = vand.u32 %v53, 4294901760
    %v247 = vsub.f32 %v53, %v246
    %v248 = vand.u32 %v247, 4294901760
    %249 = vmatmul.f32.gmra.mxu0 %v248
    %v250 = vpop.f32.mrf.mxu0
    %v251 = vadd.f32 %v203, %v250
    %v252 = vand.u32 %v56, 4294901760
    %v253 = vsub.f32 %v56, %v252
    %v254 = vand.u32 %v253, 4294901760
    %255 = vmatmul.f32.gmra.mxu0 %v254
    %v256 = vpop.f32.mrf.mxu0
    %v257 = vadd.f32 %v208, %v256
    %258 = vdwg.mxu0
    %259 = vmatpush.msra.mxu0 0.0
    %260 = vmatpush.msra.mxu0 0.0
    %261 = vmatpush.msra.mxu0 0.0
    %262 = vmatpush.msra.mxu0 0.0
    %263 = vmatpush.msra.mxu0 0.0
    %264 = vmatpush.msra.mxu0 0.0
    %265 = vmatpush.msra.mxu0 0.0
    %266 = vmatpush.msra.mxu0 0.0
    %267 = vmatpush.msra.mxu0 0.0
    %268 = vmatpush.msra.mxu0 0.0
    %269 = vmatpush.msra.mxu0 0.0
    %270 = vmatpush.msra.mxu0 0.0
    %271 = vmatpush.msra.mxu0 0.0
    %272 = vmatpush.msra.mxu0 0.0
    %v273 = vand.u32 %v28, 4294901760
    %v274 = vsub.f32 %v28, %v273
    %v275 = vand.u32 %v274, 4294901760
    %276 = vmatpush.msra.mxu0 %v275
    %v277 = vand.u32 %v27, 4294901760
    %v278 = vsub.f32 %v27, %v277
    %v279 = vand.u32 %v278, 4294901760
    %280 = vmatpush.msra.mxu0 %v279
    %v281 = vand.u32 %v44, 4294901760
    %282 = vmatmul.f32.gmra.mxu0 %v281
    %v283 = vpop.f32.mrf.mxu0
    %v284 = vadd.f32 %v233, %v283
    %v285 = vand.u32 %v47, 4294901760
    %286 = vmatmul.f32.gmra.mxu0 %v285
    %v287 = vpop.f32.mrf.mxu0
    %v288 = vadd.f32 %v239, %v287
    %v289 = vand.u32 %v50, 4294901760
    %290 = vmatmul.f32.gmra.mxu0 %v289
    %v291 = vpop.f32.mrf.mxu0
    %v292 = vadd.f32 %v245, %v291
    %v293 = vand.u32 %v53, 4294901760
    %294 = vmatmul.f32.gmra.mxu0 %v293
    %v295 = vpop.f32.mrf.mxu0
    %v296 = vadd.f32 %v251, %v295
    %v297 = vand.u32 %v56, 4294901760
    %298 = vmatmul.f32.gmra.mxu0 %v297
    %v299 = vpop.f32.mrf.mxu0
    %v300 = vadd.f32 %v257, %v299
    %301 = vdwg.mxu0
    %302 = vmatpush.msra.mxu0 0.0
    %303 = vmatpush.msra.mxu0 0.0
    %304 = vmatpush.msra.mxu0 0.0
    %305 = vmatpush.msra.mxu0 0.0
    %306 = vmatpush.msra.mxu0 0.0
    %307 = vmatpush.msra.mxu0 0.0
    %308 = vmatpush.msra.mxu0 0.0
    %309 = vmatpush.msra.mxu0 0.0
    %310 = vmatpush.msra.mxu0 0.0
    %311 = vmatpush.msra.mxu0 0.0
    %312 = vmatpush.msra.mxu0 0.0
    %313 = vmatpush.msra.mxu0 0.0
    %314 = vmatpush.msra.mxu0 0.0
    %315 = vmatpush.msra.mxu0 0.0
    %v316 = vand.u32 %v28, 4294901760
    %317 = vmatpush.msra.mxu0 %v316
    %v318 = vand.u32 %v27, 4294901760
    %319 = vmatpush.msra.mxu0 %v318
    %v320 = vand.u32 %v44, 4294901760
    %321 = vmatmul.f32.gmra.mxu0 %v320
    %v322 = vpop.f32.mrf.mxu0
    %v323 = vadd.f32 %v284, %v322
    %v324 = vand.u32 %v47, 4294901760
    %325 = vmatmul.f32.gmra.mxu0 %v324
    %v326 = vpop.f32.mrf.mxu0
    %v327 = vadd.f32 %v288, %v326
    %v328 = vand.u32 %v50, 4294901760
    %329 = vmatmul.f32.gmra.mxu0 %v328
    %v330 = vpop.f32.mrf.mxu0
    %v331 = vadd.f32 %v292, %v330
    %v332 = vand.u32 %v53, 4294901760
    %333 = vmatmul.f32.gmra.mxu0 %v332
    %v334 = vpop.f32.mrf.mxu0
    %v335 = vadd.f32 %v296, %v334
    %v336 = vand.u32 %v56, 4294901760
    %337 = vmatmul.f32.gmra.mxu0 %v336
    %v338 = vpop.f32.mrf.mxu0
    %v339 = vadd.f32 %v300, %v338
    %340 = vdwg.mxu0
    %v341 = vld [vmem:[%s3] sm:$0xff]
    %v342 = vld [vmem:[%s3 + $0x8] sm:$0xff]
    %v343 = vld [vmem:[%s3 + $0x10] sm:$0xff]
    %v344 = vld [vmem:[%s3 + $0x18] sm:$0xff]
    %v345 = vld [vmem:[%s3 + $0x20] sm:$0xff]
    %v347 = vsel %vm42, %v341, 0
    %v350 = vsel %vm42, %v342, 0
    %v353 = vsel %vm42, %v343, 0
    %v356 = vsel %vm42, %v344, 0
    %v359 = vsel %vm42, %v345, 0
    %361 = vmatpush.msra.mxu0 0.0
    %362 = vmatpush.msra.mxu0 0.0
    %363 = vmatpush.msra.mxu0 0.0
    %364 = vmatpush.msra.mxu0 0.0
    %365 = vmatpush.msra.mxu0 0.0
    %366 = vmatpush.msra.mxu0 0.0
    %367 = vmatpush.msra.mxu0 0.0
    %368 = vmatpush.msra.mxu0 0.0
    %369 = vmatpush.msra.mxu0 0.0
    %370 = vmatpush.msra.mxu0 0.0
    %371 = vmatpush.msra.mxu0 0.0
    %372 = vmatpush.msra.mxu0 0.0
    %373 = vmatpush.msra.mxu0 0.0
    %374 = vmatpush.msra.mxu0 0.0
    %v375 = vand.u32 %v36, 4294901760
    %376 = vmatpush.msra.mxu0 %v375
    %v377 = vand.u32 %v35, 4294901760
    %378 = vmatpush.msra.mxu0 %v377
    %v379 = vand.u32 %v347, 4294901760
    %v380 = vsub.f32 %v347, %v379
    %v381 = vand.u32 %v380, 4294901760
    %v382 = vsub.f32 %v380, %v381
    %v383 = vand.u32 %v382, 4294901760
    %384 = vmatmul.f32.gmra.mxu0 %v383
    %v385 = vpop.f32.mrf.mxu0
    %v386 = vadd.f32 0.0, %v385
    %v387 = vand.u32 %v350, 4294901760
    %v388 = vsub.f32 %v350, %v387
    %v389 = vand.u32 %v388, 4294901760
    %v390 = vsub.f32 %v388, %v389
    %v391 = vand.u32 %v390, 4294901760
    %392 = vmatmul.f32.gmra.mxu0 %v391
    %v393 = vpop.f32.mrf.mxu0
    %v394 = vadd.f32 0.0, %v393
    %v395 = vand.u32 %v353, 4294901760
    %v396 = vsub.f32 %v353, %v395
    %v397 = vand.u32 %v396, 4294901760
    %v398 = vsub.f32 %v396, %v397
    %v399 = vand.u32 %v398, 4294901760
    %400 = vmatmul.f32.gmra.mxu0 %v399
    %v401 = vpop.f32.mrf.mxu0
    %v402 = vadd.f32 0.0, %v401
    %v403 = vand.u32 %v356, 4294901760
    %v404 = vsub.f32 %v356, %v403
    %v405 = vand.u32 %v404, 4294901760
    %v406 = vsub.f32 %v404, %v405
    %v407 = vand.u32 %v406, 4294901760
    %408 = vmatmul.f32.gmra.mxu0 %v407
    %v409 = vpop.f32.mrf.mxu0
    %v410 = vadd.f32 0.0, %v409
    %v411 = vand.u32 %v359, 4294901760
    %v412 = vsub.f32 %v359, %v411
    %v413 = vand.u32 %v412, 4294901760
    %v414 = vsub.f32 %v412, %v413
    %v415 = vand.u32 %v414, 4294901760
    %416 = vmatmul.f32.gmra.mxu0 %v415
    %v417 = vpop.f32.mrf.mxu0
    %v418 = vadd.f32 0.0, %v417
    %419 = vdwg.mxu0
    %420 = vmatpush.msra.mxu0 0.0
    %421 = vmatpush.msra.mxu0 0.0
    %422 = vmatpush.msra.mxu0 0.0
    %423 = vmatpush.msra.mxu0 0.0
    %424 = vmatpush.msra.mxu0 0.0
    %425 = vmatpush.msra.mxu0 0.0
    %426 = vmatpush.msra.mxu0 0.0
    %427 = vmatpush.msra.mxu0 0.0
    %428 = vmatpush.msra.mxu0 0.0
    %429 = vmatpush.msra.mxu0 0.0
    %430 = vmatpush.msra.mxu0 0.0
    %431 = vmatpush.msra.mxu0 0.0
    %432 = vmatpush.msra.mxu0 0.0
    %433 = vmatpush.msra.mxu0 0.0
    %v434 = vand.u32 %v36, 4294901760
    %v435 = vsub.f32 %v36, %v434
    %v436 = vand.u32 %v435, 4294901760
    %v437 = vsub.f32 %v435, %v436
    %v438 = vand.u32 %v437, 4294901760
    %439 = vmatpush.msra.mxu0 %v438
    %v440 = vand.u32 %v35, 4294901760
    %v441 = vsub.f32 %v35, %v440
    %v442 = vand.u32 %v441, 4294901760
    %v443 = vsub.f32 %v441, %v442
    %v444 = vand.u32 %v443, 4294901760
    %445 = vmatpush.msra.mxu0 %v444
    %v446 = vand.u32 %v347, 4294901760
    %447 = vmatmul.f32.gmra.mxu0 %v446
    %v448 = vpop.f32.mrf.mxu0
    %v449 = vadd.f32 %v386, %v448
    %v450 = vand.u32 %v350, 4294901760
    %451 = vmatmul.f32.gmra.mxu0 %v450
    %v452 = vpop.f32.mrf.mxu0
    %v453 = vadd.f32 %v394, %v452
    %v454 = vand.u32 %v353, 4294901760
    %455 = vmatmul.f32.gmra.mxu0 %v454
    %v456 = vpop.f32.mrf.mxu0
    %v457 = vadd.f32 %v402, %v456
    %v458 = vand.u32 %v356, 4294901760
    %459 = vmatmul.f32.gmra.mxu0 %v458
    %v460 = vpop.f32.mrf.mxu0
    %v461 = vadd.f32 %v410, %v460
    %v462 = vand.u32 %v359, 4294901760
    %463 = vmatmul.f32.gmra.mxu0 %v462
    %v464 = vpop.f32.mrf.mxu0
    %v465 = vadd.f32 %v418, %v464
    %466 = vdwg.mxu0
    %467 = vmatpush.msra.mxu0 0.0
    %468 = vmatpush.msra.mxu0 0.0
    %469 = vmatpush.msra.mxu0 0.0
    %470 = vmatpush.msra.mxu0 0.0
    %471 = vmatpush.msra.mxu0 0.0
    %472 = vmatpush.msra.mxu0 0.0
    %473 = vmatpush.msra.mxu0 0.0
    %474 = vmatpush.msra.mxu0 0.0
    %475 = vmatpush.msra.mxu0 0.0
    %476 = vmatpush.msra.mxu0 0.0
    %477 = vmatpush.msra.mxu0 0.0
    %478 = vmatpush.msra.mxu0 0.0
    %479 = vmatpush.msra.mxu0 0.0
    %480 = vmatpush.msra.mxu0 0.0
    %v481 = vand.u32 %v36, 4294901760
    %v482 = vsub.f32 %v36, %v481
    %483 = vmatpush.msra.mxu0 %v482
    %v484 = vand.u32 %v35, 4294901760
    %v485 = vsub.f32 %v35, %v484
    %486 = vmatpush.msra.mxu0 %v485
    %v487 = vand.u32 %v347, 4294901760
    %v488 = vsub.f32 %v347, %v487
    %489 = vmatmul.f32.gmra.mxu0 %v488
    %v490 = vpop.f32.mrf.mxu0
    %v491 = vadd.f32 %v449, %v490
    %v492 = vand.u32 %v350, 4294901760
    %v493 = vsub.f32 %v350, %v492
    %494 = vmatmul.f32.gmra.mxu0 %v493
    %v495 = vpop.f32.mrf.mxu0
    %v496 = vadd.f32 %v453, %v495
    %v497 = vand.u32 %v353, 4294901760
    %v498 = vsub.f32 %v353, %v497
    %499 = vmatmul.f32.gmra.mxu0 %v498
    %v500 = vpop.f32.mrf.mxu0
    %v501 = vadd.f32 %v457, %v500
    %v502 = vand.u32 %v356, 4294901760
    %v503 = vsub.f32 %v356, %v502
    %504 = vmatmul.f32.gmra.mxu0 %v503
    %v505 = vpop.f32.mrf.mxu0
    %v506 = vadd.f32 %v461, %v505
    %v507 = vand.u32 %v359, 4294901760
    %v508 = vsub.f32 %v359, %v507
    %509 = vmatmul.f32.gmra.mxu0 %v508
    %v510 = vpop.f32.mrf.mxu0
    %v511 = vadd.f32 %v465, %v510
    %512 = vdwg.mxu0
    %513 = vmatpush.msra.mxu0 0.0
    %514 = vmatpush.msra.mxu0 0.0
    %515 = vmatpush.msra.mxu0 0.0
    %516 = vmatpush.msra.mxu0 0.0
    %517 = vmatpush.msra.mxu0 0.0
    %518 = vmatpush.msra.mxu0 0.0
    %519 = vmatpush.msra.mxu0 0.0
    %520 = vmatpush.msra.mxu0 0.0
    %521 = vmatpush.msra.mxu0 0.0
    %522 = vmatpush.msra.mxu0 0.0
    %523 = vmatpush.msra.mxu0 0.0
    %524 = vmatpush.msra.mxu0 0.0
    %525 = vmatpush.msra.mxu0 0.0
    %526 = vmatpush.msra.mxu0 0.0
    %v527 = vand.u32 %v36, 4294901760
    %528 = vmatpush.msra.mxu0 %v527
    %v529 = vand.u32 %v35, 4294901760
    %530 = vmatpush.msra.mxu0 %v529
    %v531 = vand.u32 %v347, 4294901760
    %v532 = vsub.f32 %v347, %v531
    %v533 = vand.u32 %v532, 4294901760
    %534 = vmatmul.f32.gmra.mxu0 %v533
    %v535 = vpop.f32.mrf.mxu0
    %v536 = vadd.f32 %v491, %v535
    %v537 = vand.u32 %v350, 4294901760
    %v538 = vsub.f32 %v350, %v537
    %v539 = vand.u32 %v538, 4294901760
    %540 = vmatmul.f32.gmra.mxu0 %v539
    %v541 = vpop.f32.mrf.mxu0
    %v542 = vadd.f32 %v496, %v541
    %v543 = vand.u32 %v353, 4294901760
    %v544 = vsub.f32 %v353, %v543
    %v545 = vand.u32 %v544, 4294901760
    %546 = vmatmul.f32.gmra.mxu0 %v545
    %v547 = vpop.f32.mrf.mxu0
    %v548 = vadd.f32 %v501, %v547
    %v549 = vand.u32 %v356, 4294901760
    %v550 = vsub.f32 %v356, %v549
    %v551 = vand.u32 %v550, 4294901760
    %552 = vmatmul.f32.gmra.mxu0 %v551
    %v553 = vpop.f32.mrf.mxu0
    %v554 = vadd.f32 %v506, %v553
    %v555 = vand.u32 %v359, 4294901760
    %v556 = vsub.f32 %v359, %v555
    %v557 = vand.u32 %v556, 4294901760
    %558 = vmatmul.f32.gmra.mxu0 %v557
    %v559 = vpop.f32.mrf.mxu0
    %v560 = vadd.f32 %v511, %v559
    %561 = vdwg.mxu0
    %562 = vmatpush.msra.mxu0 0.0
    %563 = vmatpush.msra.mxu0 0.0
    %564 = vmatpush.msra.mxu0 0.0
    %565 = vmatpush.msra.mxu0 0.0
    %566 = vmatpush.msra.mxu0 0.0
    %567 = vmatpush.msra.mxu0 0.0
    %568 = vmatpush.msra.mxu0 0.0
    %569 = vmatpush.msra.mxu0 0.0
    %570 = vmatpush.msra.mxu0 0.0
    %571 = vmatpush.msra.mxu0 0.0
    %572 = vmatpush.msra.mxu0 0.0
    %573 = vmatpush.msra.mxu0 0.0
    %574 = vmatpush.msra.mxu0 0.0
    %575 = vmatpush.msra.mxu0 0.0
    %v576 = vand.u32 %v36, 4294901760
    %v577 = vsub.f32 %v36, %v576
    %v578 = vand.u32 %v577, 4294901760
    %579 = vmatpush.msra.mxu0 %v578
    %v580 = vand.u32 %v35, 4294901760
    %v581 = vsub.f32 %v35, %v580
    %v582 = vand.u32 %v581, 4294901760
    %583 = vmatpush.msra.mxu0 %v582
    %v584 = vand.u32 %v347, 4294901760
    %585 = vmatmul.f32.gmra.mxu0 %v584
    %v586 = vpop.f32.mrf.mxu0
    %v587 = vadd.f32 %v536, %v586
    %v588 = vand.u32 %v350, 4294901760
    %589 = vmatmul.f32.gmra.mxu0 %v588
    %v590 = vpop.f32.mrf.mxu0
    %v591 = vadd.f32 %v542, %v590
    %v592 = vand.u32 %v353, 4294901760
    %593 = vmatmul.f32.gmra.mxu0 %v592
    %v594 = vpop.f32.mrf.mxu0
    %v595 = vadd.f32 %v548, %v594
    %v596 = vand.u32 %v356, 4294901760
    %597 = vmatmul.f32.gmra.mxu0 %v596
    %v598 = vpop.f32.mrf.mxu0
    %v599 = vadd.f32 %v554, %v598
    %v600 = vand.u32 %v359, 4294901760
    %601 = vmatmul.f32.gmra.mxu0 %v600
    %v602 = vpop.f32.mrf.mxu0
    %v603 = vadd.f32 %v560, %v602
    %604 = vdwg.mxu0
    %605 = vmatpush.msra.mxu0 0.0
    %606 = vmatpush.msra.mxu0 0.0
    %607 = vmatpush.msra.mxu0 0.0
    %608 = vmatpush.msra.mxu0 0.0
    %609 = vmatpush.msra.mxu0 0.0
    %610 = vmatpush.msra.mxu0 0.0
    %611 = vmatpush.msra.mxu0 0.0
    %612 = vmatpush.msra.mxu0 0.0
    %613 = vmatpush.msra.mxu0 0.0
    %614 = vmatpush.msra.mxu0 0.0
    %615 = vmatpush.msra.mxu0 0.0
    %616 = vmatpush.msra.mxu0 0.0
    %617 = vmatpush.msra.mxu0 0.0
    %618 = vmatpush.msra.mxu0 0.0
    %v619 = vand.u32 %v36, 4294901760
    %620 = vmatpush.msra.mxu0 %v619
    %v621 = vand.u32 %v35, 4294901760
    %622 = vmatpush.msra.mxu0 %v621
    %v623 = vand.u32 %v347, 4294901760
    %624 = vmatmul.f32.gmra.mxu0 %v623
    %v625 = vpop.f32.mrf.mxu0
    %v626 = vadd.f32 %v587, %v625
    %v627 = vand.u32 %v350, 4294901760
    %628 = vmatmul.f32.gmra.mxu0 %v627
    %v629 = vpop.f32.mrf.mxu0
    %v630 = vadd.f32 %v591, %v629
    %v631 = vand.u32 %v353, 4294901760
    %632 = vmatmul.f32.gmra.mxu0 %v631
    %v633 = vpop.f32.mrf.mxu0
    %v634 = vadd.f32 %v595, %v633
    %v635 = vand.u32 %v356, 4294901760
    %636 = vmatmul.f32.gmra.mxu0 %v635
    %v637 = vpop.f32.mrf.mxu0
    %v638 = vadd.f32 %v599, %v637
    %v639 = vand.u32 %v359, 4294901760
    %640 = vmatmul.f32.gmra.mxu0 %v639
    %v641 = vpop.f32.mrf.mxu0
    %v642 = vadd.f32 %v603, %v641
    %643 = vdwg.mxu0
    %v644 = vmul.f32 %v323, %v626
    %v645 = vmul.f32 %v327, %v630
    %v646 = vmul.f32 %v331, %v634
    %v647 = vmul.f32 %v335, %v638
    %v648 = vmul.f32 %v339, %v642
    %v649 = vadd.f32 %v644, %v645
    %v650 = vadd.f32 %v649, %v646
    %v651 = vadd.f32 %v650, %v647
    %v652 = vadd.f32 %v651, %v648
    %v653 = vrot.slane %v652, 4
    %v654 = vadd.f32 %v652, %v653
    %v655 = vrot.slane %v654, 2
    %v656 = vadd.f32 %v654, %v655
    %v657 = vrot.slane %v656, 1
    %v658 = vadd.f32 %v656, %v657
    %v659 = vxor.u32 %v658, 2147483648
    %v660 = vmul.f32 %v659, 1.442695
    %v661 = vpow.pop %v660
    %v662 = vadd.f32 %v661, 1.0
    %v663 = vrcp.pop %v662
    %v664 = vmul.f32 %v662, %v663
    %v665 = vsub.f32 1.0, %v664
    %v666 = vmul.f32 %v663, %v665
    %v667 = vadd.f32 %v663, %v666
    %vm668 = vweird.f32 %v662
    %vm669 = vweird.f32 %v663
    %vm670 = vmor %vm668, %vm669
    %v671 = vsel %vm670, %v663, %v667
    %v672 = vand.u32 2147483647, %v662
    %vm673 = vcmp.eq.f32.partialorder %v672, 8.507059e+37
    %v674 = vand.u32 %v662, 2147483648
    %v675 = vor.u32 1.1754944e-38, %v674
    %v676 = vsel %vm673, %v675, %v671
    %v677 = vmul.f32 1.0, %v676
    %v678 = vmul.f32 %v677, 5.5
    %v679 = vadd.f32 %v678, 0.0
    %680 = vst [vmem:[#allocation2] sm:$0x1] %v679
    // Predicated region
    $region18: #{tpu_custom_call.1} parent=1 // pred_check
      _
    $region19: #{tpu_custom_call.1} parent=1 // pred_check_branch
      %682 = sbr.rel (0) target = $region21
    $region20: #{tpu_custom_call.1} parent=1 // pred_region
      %684 = vsyncadd [#allocation3], 0
      %s686 = sshll.u32 [#allocation2], 4
      %s687 = int_to_ptr.vmem [resolvable:$true] %s686
      %s688 = sshll.u32 %s4, 4
      %s689 = int_to_ptr.hbm [resolvable:$true] %s688
      %691 = dma.vmem_to_hbm [thread:$0]  %s687, 16, %s689, [#allocation3]
    $region21: #{tpu_custom_call.1} parent=1 // pred_fallthru
      _
    // Predicated region
    $region22: #{tpu_custom_call.1} parent=1 // pred_check
      _
    $region23: #{tpu_custom_call.1} parent=1 // pred_check_branch
      %693 = sbr.rel (0) target = $region25
    $region24: #{tpu_custom_call.1} parent=1 // pred_region
      %695 = dma.done [#allocation3], 16
    $region25: #{tpu_custom_call.1} parent=1 // pred_fallthru
      _
    %696 = vsyncpa [#allocation3], 1

</llo_original>
